<compile_context>
chip_gen: v5e
topology: v5e:2x2
jax: 0.10.0
libtpu: 0.0.40
codegen_flags: <defaults>
</compile_context>

<pallas_src>
import math

import jax
import jax.numpy as jnp
from jax import lax
from jax.experimental import pallas as pl
from jax.experimental.pallas import tpu as pltpu


def _round_up(x, m):
    return ((x + m - 1) // m) * m


def _cdiv(a, b):
    return (a + b - 1) // b


def _pad_cols(a, ncols):
    return jnp.pad(a, ((0, 0), (0, ncols - a.shape[1])))


def _pad_2d(a, nrows, ncols):
    return jnp.pad(a, ((0, nrows - a.shape[0]), (0, ncols - a.shape[1])))


def _gelu_tanh(x):
    # transformers ACT2FN['gelu_new'] (tanh approximation of GELU), f32 math.
    return 0.5 * x * (1.0 + jnp.tanh(0.7978845608028654 * (x + 0.044715 * x * x * x)))


def _tpu_defaults():
    """Per-generation (block_rows, vmem_limit_bytes) defaults.

    v5e / v6e have 128 MiB VMEM per TensorCore -> big tiles, ~100 MiB budget.
    v7x has 64 MiB per TensorCore -> smaller tiles, 48 MiB budget.
    """
    try:
        cap = pltpu.get_tpu_info().vmem_capacity_bytes
    except Exception:
        cap = 64 * 1024 * 1024  # conservative: assume the 64 MiB (v7x) part
    if cap >= 96 * 1024 * 1024:
        return 1024, 100 * 1024 * 1024
    return 256, 48 * 1024 * 1024


def _choose_h_chunk(d_h_128, max_chunk=1024):
    """Pick an in-kernel hidden-dim chunk (multiple of 128) and padded d_h."""
    num_chunks = max(1, _cdiv(d_h_128, max_chunk))
    h_chunk = _round_up(_cdiv(d_h_128, num_chunks), 128)
    return h_chunk, num_chunks * h_chunk


def make_adapter_kernel(num_h_chunks, h_chunk):
    def adapter_kernel(x_ref, w1_ref, b1_ref, w2_ref, b2_ref, o_ref, acc_ref):
        # x_ref:  [TN, D_in]  bf16 activation tile (row-tiled over the grid)
        # w1_ref: [D_in, D_h] bf16, b1_ref: [1, D_h] f32   (VMEM-resident, single-buffered)
        # w2_ref: [D_h, D_out] bf16, b2_ref: [1, D_out] f32
        # o_ref:  [TN, D_out] bf16
        # acc_ref:[TN, D_out] f32 scratch accumulator
        x = x_ref[...]
        acc_ref[...] = jnp.zeros_like(acc_ref)

        def h_block(c, carry):
            off = pl.multiple_of(c * h_chunk, h_chunk)
            # First matmul chunk on the MXU, f32 accumulation.
            h = jnp.dot(x, w1_ref[:, pl.ds(off, h_chunk)],
                        preferred_element_type=jnp.float32)
            h = h + b1_ref[:, pl.ds(off, h_chunk)]
            # GELU in f32 on VPU/EUP (no bf16 transcendental path on v5e).
            h = _gelu_tanh(h)
            h = h.astype(w2_ref.dtype)  # back to bf16 for the second MXU pass
            # Second matmul: the hidden chunk is its reduction dim -> accumulate f32.
            acc_ref[...] += jnp.dot(h, w2_ref[pl.ds(off, h_chunk), :],
                                    preferred_element_type=jnp.float32)
            return carry

        lax.fori_loop(0, num_h_chunks, h_block, 0,
                      unroll=(num_h_chunks <= 8))
        o_ref[...] = (acc_ref[...] + b2_ref[...]).astype(o_ref.dtype)

    return adapter_kernel


def adapter_pallas(x, w1, b1, w2, b2, *, h_chunk,
                   block_rows=None, vmem_limit_bytes=None):
    """Apply the 2-layer MLP adapter: x [N, D_in] -> [N, D_out] bf16 (dims lane-padded)."""
    if block_rows is None or vmem_limit_bytes is None:
        def_rows, def_vmem = _tpu_defaults()
        block_rows = def_rows if block_rows is None else block_rows
        vmem_limit_bytes = def_vmem if vmem_limit_bytes is None else vmem_limit_bytes
    assert block_rows % 8 == 0, "block_rows must be a multiple of 8 (sublane tiling)"

    x = x.astype(jnp.bfloat16)
    n, d_in = x.shape
    d_h = w1.shape[1]
    d_out = w2.shape[1]
    assert d_h % h_chunk == 0
    num_h_chunks = d_h // h_chunk

    # Row tile: multiple of 8, <= block_rows, balanced so we get >= 2 grid
    # steps where possible (megacore sharding) with minimal row padding.
    n_tiles = max(2, _cdiv(n, block_rows))
    tn = _round_up(_cdiv(n, n_tiles), 8)
    tn = min(tn, _round_up(n, 8))
    n_pad = _round_up(n, tn)
    if n_pad != n:
        x = jnp.pad(x, ((0, n_pad - n), (0, 0)))
    grid = (n_pad // tn,)

    resident = pl.Buffered(buffer_count=1)  # constant index_map -> no double buffer
    out = pl.pallas_call(
        make_adapter_kernel(num_h_chunks, h_chunk),
        out_shape=jax.ShapeDtypeStruct((n_pad, d_out), jnp.bfloat16),
        grid=grid,
        in_specs=[
            pl.BlockSpec((tn, d_in), lambda i: (i, 0)),            # activation tile
            pl.BlockSpec((d_in, d_h), lambda i: (0, 0), pipeline_mode=resident),   # W1
            pl.BlockSpec((1, d_h), lambda i: (0, 0), pipeline_mode=resident),      # b1
            pl.BlockSpec((d_h, d_out), lambda i: (0, 0), pipeline_mode=resident),  # W2
            pl.BlockSpec((1, d_out), lambda i: (0, 0), pipeline_mode=resident),    # b2
        ],
        out_specs=pl.BlockSpec((tn, d_out), lambda i: (i, 0)),
        scratch_shapes=[pltpu.VMEM((tn, d_out), jnp.float32)],
        compiler_params=pltpu.CompilerParams(
            dimension_semantics=("parallel",),    # megacore row sharding
            vmem_limit_bytes=vmem_limit_bytes,
        ),
    )(x, w1, b1, w2, b2)
    return out[:n]


def xavier_uniform(key, fan_in, fan_out, dtype=jnp.float32):
    # Matches torch.nn.init.xavier_uniform_ bound; stored as [in, out].
    a = math.sqrt(6.0 / (fan_in + fan_out))
    return jax.random.uniform(key, (fan_in, fan_out), dtype=dtype, minval=-a, maxval=a)


class EmbeddingModelPallas:
    def __init__(self, key, num_entities, num_queries, emb_dim,
                 intermediate_dim, output_dim,
                 block_rows=None, vmem_limit_bytes=None, max_h_chunk=1024):
        self.emb_dim = emb_dim
        self.intermediate_dim = intermediate_dim
        self.output_dim = output_dim
        self.block_rows = block_rows
        self.vmem_limit_bytes = vmem_limit_bytes

        # Lane-pad every feature dim to a multiple of 128 once at init; the
        # hidden dim is additionally padded to a multiple of the in-kernel chunk.
        self.d_in = _round_up(emb_dim, 128)
        self.d_out = _round_up(output_dim, 128)
        self.h_chunk, self.d_h = _choose_h_chunk(_round_up(intermediate_dim, 128),
                                                 max_chunk=max_h_chunk)

        k_ent, k_qry, k_w1, k_w2 = jax.random.split(key, 4)

        # Frozen "pretrained" embedding tables (synthetic, deterministic),
        # stored lane-padded + bf16 (halves gather HBM traffic, MXU-ready).
        # NOTE: bf16 tables are a deliberate precision trade-off vs the f32
        # PyTorch reference (~1e-2-level deviations).
        ent = jax.random.normal(k_ent, (num_entities, emb_dim), jnp.float32)
        qry = jax.random.normal(k_qry, (num_queries, emb_dim), jnp.float32)
        self.ent_emb = _pad_cols(ent, self.d_in).astype(jnp.bfloat16)
        self.query_emb = _pad_cols(qry, self.d_in).astype(jnp.bfloat16)

        # Adapter params (xavier-uniform weights, zero biases), zero-padded so
        # padded rows/cols contribute exactly 0, stored bf16 (biases f32).
        w1 = xavier_uniform(k_w1, emb_dim, intermediate_dim)
        w2 = xavier_uniform(k_w2, intermediate_dim, output_dim)
        self.w1 = _pad_2d(w1, self.d_in, self.d_h).astype(jnp.bfloat16)
        self.w2 = _pad_2d(w2, self.d_h, self.d_out).astype(jnp.bfloat16)
        self.b1 = jnp.zeros((1, self.d_h), jnp.float32)
        self.b2 = jnp.zeros((1, self.d_out), jnp.float32)

    def __call__(self, query_ids, entity_ids):
        nq = query_ids.shape[0]
        # Embedding lookup = gather (glue, plain JAX).
        # TODO(synk): fuse the gather into the kernel via scalar-prefetched ids
        # + per-row make_async_copy to avoid this HBM slab round-trip.
        q_in = jnp.take(self.query_emb, query_ids, axis=0)   # [B, d_in] bf16
        e_in = jnp.take(self.ent_emb, entity_ids, axis=0)    # [B*top_k, d_in] bf16
        # Single fused adapter pass over the concatenated activation slab:
        # one kernel launch, one weight DMA, one larger M for the MXU.
        x = jnp.concatenate([q_in, e_in], axis=0)
        y = adapter_pallas(x, self.w1, self.b1, self.w2, self.b2,
                           h_chunk=self.h_chunk,
                           block_rows=self.block_rows,
                           vmem_limit_bytes=self.vmem_limit_bytes)
        y = y[:, :self.output_dim]                            # drop lane padding
        return y[:nq], y[nq:]


if __name__ == "__main__":
    key = jax.random.PRNGKey(0)
    k_model, k_q, k_e = jax.random.split(key, 3)

    # Small, module-consistent shapes (toy sizes: launch-overhead bound;
    # the tiling/dtype choices above are aimed at production dims).
    num_entities, num_queries = 64, 16
    emb_dim, intermediate_dim, output_dim = 32, 64, 32
    batch_size, top_k = 2, 4

    model = EmbeddingModelPallas(k_model, num_entities, num_queries,
                                 emb_dim, intermediate_dim, output_dim)

    query_ids = jax.random.randint(k_q, (batch_size,), 0, num_queries)
    entity_ids = jax.random.randint(k_e, (batch_size * top_k,), 0, num_entities)

    query_embeds, ent_embeds = model(query_ids, entity_ids)
    jax.block_until_ready((query_embeds, ent_embeds))

    # Pure-JAX reference mirroring the kernel's precision
    # (bf16 inputs/weights, f32 accumulation, f32 GELU, bf16 output).
    def ref_adapter(x_bf16):
        h = jnp.dot(x_bf16, model.w1, preferred_element_type=jnp.float32) + model.b1
        h = _gelu_tanh(h).astype(jnp.bfloat16)
        y = jnp.dot(h, model.w2, preferred_element_type=jnp.float32) + model.b2
        return y.astype(jnp.bfloat16)[:, :output_dim]

    q_ref = ref_adapter(jnp.take(model.query_emb, query_ids, axis=0))
    e_ref = ref_adapter(jnp.take(model.ent_emb, entity_ids, axis=0))

    assert query_embeds.shape == (batch_size, output_dim)
    assert ent_embeds.shape == (batch_size * top_k, output_dim)
    assert query_embeds.dtype == jnp.bfloat16
    assert jnp.allclose(query_embeds.astype(jnp.float32), q_ref.astype(jnp.float32),
                        atol=2e-2, rtol=2e-2)
    assert jnp.allclose(ent_embeds.astype(jnp.float32), e_ref.astype(jnp.float32),
                        atol=2e-2, rtol=2e-2)

    print("KERNEL_OK")
</pallas_src>

<mosaic_0001>
module attributes {stable_mosaic.version = 11 : i64} {
  func.func @adapter_kernel(%arg0: i32, %arg1: memref<8x128xbf16, #tpu.memory_space<vmem>>, %arg2: memref<128x128xbf16, #tpu.memory_space<vmem>>, %arg3: memref<1x128xf32, #tpu.memory_space<vmem>>, %arg4: memref<128x128xbf16, #tpu.memory_space<vmem>>, %arg5: memref<1x128xf32, #tpu.memory_space<vmem>>, %arg6: memref<8x128xbf16, #tpu.memory_space<vmem>>, %arg7: memref<8x128xf32, #tpu.memory_space<vmem>>) attributes {dimension_semantics = [#tpu.dimension_semantics<parallel>], iteration_bounds = array<i64: 2>, scalar_prefetch = 0 : i64, scratch_operands = 1 : i64, tpu.core_type = #tpu.core_type<tc>, window_params = [{transform_indices = @transform_0, window_bounds = array<i64: 8, 128>}, {pipeline_mode = #tpu.pipeline_mode<synchronous>, transform_indices = @transform_1, window_bounds = array<i64: 128, 128>}, {pipeline_mode = #tpu.pipeline_mode<synchronous>, transform_indices = @transform_2, window_bounds = array<i64: 1, 128>}, {pipeline_mode = #tpu.pipeline_mode<synchronous>, transform_indices = @transform_3, window_bounds = array<i64: 128, 128>}, {pipeline_mode = #tpu.pipeline_mode<synchronous>, transform_indices = @transform_4, window_bounds = array<i64: 1, 128>}, {transform_indices = @transform_5, window_bounds = array<i64: 8, 128>}]} {
    %c0 = arith.constant 0 : index
    %c0_0 = arith.constant 0 : index
    %0 = vector.load %arg1[%c0, %c0_0] : memref<8x128xbf16, #tpu.memory_space<vmem>>, vector<8x128xbf16>
    %cst = arith.constant 0.000000e+00 : f32
    %1 = vector.broadcast %cst : f32 to vector<8x128xf32>
    %c0_1 = arith.constant 0 : index
    %c0_2 = arith.constant 0 : index
    %2 = vector.load %arg7[%c0_1, %c0_2] : memref<8x128xf32, #tpu.memory_space<vmem>>, vector<8x128xf32>
    tpu.vector_store %arg7[%c0_1, %c0_2], %1 {strides = array<i32>} : memref<8x128xf32, #tpu.memory_space<vmem>>, vector<8x128xf32>,
    %c0_i32 = arith.constant 0 : i32
    %c128_i32 = arith.constant 128 : i32
    %3 = arith.muli %c0_i32, %c128_i32 : i32
    %4 = tpu.assume_multiple %3, 128 : i32
    %c0_3 = arith.constant 0 : index
    %5 = arith.index_cast %4 : i32 to index
    %6 = vector.load %arg2[%c0_3, %5] : memref<128x128xbf16, #tpu.memory_space<vmem>>, vector<128x128xbf16>
    %cst_4 = arith.constant dense<0.000000e+00> : vector<8x128xf32>
    %7 = tpu.matmul %0, %6, %cst_4 {dimension_numbers = #tpu.dot_dimension_numbers<[1], [0], [0], [1], [0, 0, 1, 1], [], []>} : vector<8x128xbf16>, vector<128x128xbf16>, vector<8x128xf32> -> vector<8x128xf32>
    %c0_5 = arith.constant 0 : index
    %8 = arith.index_cast %4 : i32 to index
    %9 = vector.load %arg3[%c0_5, %8] : memref<1x128xf32, #tpu.memory_space<vmem>>, vector<1x128xf32>
    %10 = vector.broadcast %9 : vector<1x128xf32> to vector<8x128xf32>
    %11 = arith.addf %7, %10 : vector<8x128xf32>
    %cst_6 = arith.constant 5.000000e-01 : f32
    %12 = vector.broadcast %cst_6 : f32 to vector<8x128xf32>
    %13 = arith.mulf %12, %11 : vector<8x128xf32>
    %cst_7 = arith.constant 4.471500e-02 : f32
    %14 = vector.broadcast %cst_7 : f32 to vector<8x128xf32>
    %15 = arith.mulf %14, %11 : vector<8x128xf32>
    %16 = arith.mulf %15, %11 : vector<8x128xf32>
    %17 = arith.mulf %16, %11 : vector<8x128xf32>
    %18 = arith.addf %11, %17 : vector<8x128xf32>
    %cst_8 = arith.constant 0.797884583 : f32
    %19 = vector.broadcast %cst_8 : f32 to vector<8x128xf32>
    %20 = arith.mulf %19, %18 : vector<8x128xf32>
    %21 = math.tanh %20 : vector<8x128xf32>
    %cst_9 = arith.constant 1.000000e+00 : f32
    %22 = vector.broadcast %cst_9 : f32 to vector<8x128xf32>
    %23 = arith.addf %22, %21 : vector<8x128xf32>
    %24 = arith.mulf %13, %23 : vector<8x128xf32>
    %25 = arith.truncf %24 : vector<8x128xf32> to vector<8x128xbf16>
    %c0_10 = arith.constant 0 : index
    %c0_11 = arith.constant 0 : index
    %26 = vector.load %arg7[%c0_10, %c0_11] : memref<8x128xf32, #tpu.memory_space<vmem>>, vector<8x128xf32>
    %27 = arith.index_cast %4 : i32 to index
    %c0_12 = arith.constant 0 : index
    %28 = vector.load %arg4[%27, %c0_12] : memref<128x128xbf16, #tpu.memory_space<vmem>>, vector<128x128xbf16>
    %cst_13 = arith.constant dense<0.000000e+00> : vector<8x128xf32>
    %29 = tpu.matmul %25, %28, %cst_13 {dimension_numbers = #tpu.dot_dimension_numbers<[1], [0], [0], [1], [0, 0, 1, 1], [], []>} : vector<8x128xbf16>, vector<128x128xbf16>, vector<8x128xf32> -> vector<8x128xf32>
    %30 = arith.addf %26, %29 : vector<8x128xf32>
    %c0_14 = arith.constant 0 : index
    %c0_15 = arith.constant 0 : index
    %31 = vector.load %arg7[%c0_14, %c0_15] : memref<8x128xf32, #tpu.memory_space<vmem>>, vector<8x128xf32>
    tpu.vector_store %arg7[%c0_14, %c0_15], %30 {strides = array<i32>} : memref<8x128xf32, #tpu.memory_space<vmem>>, vector<8x128xf32>,
    %c1_i32 = arith.constant 1 : i32
    %c0_16 = arith.constant 0 : index
    %c0_17 = arith.constant 0 : index
    %32 = vector.load %arg7[%c0_16, %c0_17] : memref<8x128xf32, #tpu.memory_space<vmem>>, vector<8x128xf32>
    %c0_18 = arith.constant 0 : index
    %c0_19 = arith.constant 0 : index
    %33 = vector.load %arg5[%c0_18, %c0_19] : memref<1x128xf32, #tpu.memory_space<vmem>>, vector<1x128xf32>
    %34 = vector.broadcast %33 : vector<1x128xf32> to vector<8x128xf32>
    %35 = arith.addf %32, %34 : vector<8x128xf32>
    %36 = arith.truncf %35 : vector<8x128xf32> to vector<8x128xbf16>
    %c0_20 = arith.constant 0 : index
    %c0_21 = arith.constant 0 : index
    %37 = vector.load %arg6[%c0_20, %c0_21] : memref<8x128xbf16, #tpu.memory_space<vmem>>, vector<8x128xbf16>
    tpu.vector_store %arg6[%c0_20, %c0_21], %36 {strides = array<i32>} : memref<8x128xbf16, #tpu.memory_space<vmem>>, vector<8x128xbf16>,
    return
  }
  func.func @transform_0(%arg0: i32) -> (i32, i32) {
    %c0_i32 = arith.constant 0 : i32
    %c0_i32_0 = arith.constant 0 : i32
    return %arg0, %c0_i32 : i32, i32
  }
  func.func @transform_1(%arg0: i32) -> (i32, i32) {
    %c0_i32 = arith.constant 0 : i32
    %c0_i32_0 = arith.constant 0 : i32
    %c0_i32_1 = arith.constant 0 : i32
    return %c0_i32, %c0_i32_0 : i32, i32
  }
  func.func @transform_2(%arg0: i32) -> (i32, i32) {
    %c0_i32 = arith.constant 0 : i32
    %c0_i32_0 = arith.constant 0 : i32
    %c0_i32_1 = arith.constant 0 : i32
    return %c0_i32, %c0_i32_0 : i32, i32
  }
  func.func @transform_3(%arg0: i32) -> (i32, i32) {
    %c0_i32 = arith.constant 0 : i32
    %c0_i32_0 = arith.constant 0 : i32
    %c0_i32_1 = arith.constant 0 : i32
    return %c0_i32, %c0_i32_0 : i32, i32
  }
  func.func @transform_4(%arg0: i32) -> (i32, i32) {
    %c0_i32 = arith.constant 0 : i32
    %c0_i32_0 = arith.constant 0 : i32
    %c0_i32_1 = arith.constant 0 : i32
    return %c0_i32, %c0_i32_0 : i32, i32
  }
  func.func @transform_5(%arg0: i32) -> (i32, i32) {
    %c0_i32 = arith.constant 0 : i32
    %c0_i32_0 = arith.constant 0 : i32
    return %arg0, %c0_i32 : i32, i32
  }
}

</mosaic_0001>

<llo_original>
// kernel: tpu_custom_call.1
$region0: #{tpu_custom_call.1}
  #allocation0 [shape = 'u32[]', space=smem, size = 0x4, offset = 0x4, fixed_abs, tag = 'smem constant byte address 0x4 - core index']
  #allocation1 [shape = 'u32[72,128]{1,0:T(1,128)}', space=vmem, size = 0x9000, scoped, tag = 'internal scratch']
  #allocation2 [shape = 'f32[8,128]{1,0:T(8,128)}', space=vmem, size = 0x1000, scoped, tag = 'scratch operand']
  %s0 = inlined_call_operand.hbm [shape: bf16[16,128], index: 0, kind: input, shape index: {}]
  %s1 = inlined_call_operand.hbm [shape: bf16[128,128], index: 1, kind: input, shape index: {}]
  %s2 = inlined_call_operand.vmem [shape: f32[1,128], index: 2, kind: input, shape index: {}]
  %s3 = inlined_call_operand.hbm [shape: bf16[128,128], index: 3, kind: input, shape index: {}]
  %s4 = inlined_call_operand.vmem [shape: f32[1,128], index: 4, kind: input, shape index: {}]
  %s5 = inlined_call_operand.hbm [shape: bf16[16,128], index: 5, kind: output, shape index: {}]
  %s6 = sld [smem:[#allocation0]]
  $region65: #{tpu_custom_call.1} parent=0
    _
  %s8 = ssub.s32 1, %s6
  %s9 = scalar_select 0, %s8, %s6
  $region1: #{tpu_custom_call.1} parent=0
    #allocation3 [shape = 'u8[4096]{0}', space=vmem, size = 0x1000, scoped, tag = 'input window, operand 0']
    #allocation4 [shape = 's32[2]{0}', space=sflag, size = 0x8, scoped, tag = 'scoped memory for tpu_custom_call.1']
    #allocation5 [shape = 's32[2]{0}', space=sflag, size = 0x8, scoped, tag = 'scoped memory for tpu_custom_call.1']
    #allocation6 [shape = 'u8[32768]{0}', space=vmem, size = 0x8000, scoped, tag = 'input window, operand 1, single buffered']
    #allocation7 [shape = 's32[1]{0}', space=sflag, size = 0x4, scoped, tag = 'scoped memory for tpu_custom_call.1']
    #allocation8 [shape = 'u8[32768]{0}', space=vmem, size = 0x8000, scoped, tag = 'input window, operand 3, single buffered']
    #allocation9 [shape = 'u8[4096]{0}', space=vmem, size = 0x1000, scoped, tag = 'output window, operand 0']
    %10 = vsyncpa [#allocation4], 0
    %s11 = scalar_lea.sflag [#allocation4], 1
    %12 = vsyncpa %s11, 0
    %13 = vsyncpa [#allocation7], 0
    %14 = vsyncpa [#allocation5], 0
    %s15 = scalar_lea.sflag [#allocation5], 1
    %16 = vsyncpa %s15, 0
    loop: start=0, step=1, limit=4
    $region2: #{tpu_custom_call.1} parent=1 // loop_pre_header
      _
    $region3: #{tpu_custom_call.1} parent=1 // loop_header
      %s18 = sphi 0, %s22
      %p19 = scmp.ge.s32.totalorder %s18, 4
      %s28 = sphi 0, %s30
      %s31 = sphi 0, %s28
      %s32 = sphi 0, %s31
      %s48 = sphi 0, %s32
      %s52 = sphi 0, %s52
      %s54 = sphi 0, %s52
      %s55 = sphi 0, %s54
      %s69 = sphi 0, %s55
      %s73 = sphi 0, %s73
      %s75 = sphi 0, %s73
      %s76 = sphi 0, %s75
      %s90 = sphi 0, %s76
      %s94 = sphi 0, %s94
      %s96 = sphi 0, %s94
      %s97 = sphi 0, %s96
      %s111 = sphi 0, %s97
      %s115 = sphi 0, %s115
      %s117 = sphi 0, %s115
      %s118 = sphi 0, %s117
      %s132 = sphi 0, %s118
      %s138 = sphi 0, %s140
      %s141 = sphi 0, %s138
      %s142 = sphi 0, %s141
      %s158 = sphi 0, %s142
    $region4: #{tpu_custom_call.1} parent=1 // loop_header_branch
      %21 = sbr.rel (%p19) target = $region8
    $region5: #{tpu_custom_call.1} parent=1 // loop_body
      %s23 = ssub.s32 %s18, 1
      %s24 = ssub.s32 %s18, 2
      %s25 = sadd.s32 %s18, 1
      %s26 = ssub.s32 %s18, %s25
      %p27 = scmp.eq.s32.totalorder %s26, 0
      %s29 = sadd.s32 %s28, 1
      %s30 = scalar_select %p27, %s28, %s29
      %p33 = pneg %p27
      %p34 = scmp.eq.s32.totalorder %s18, 1
      %p35 = por %p33, %p34
      %p36 = scmp.ne.s32.totalorder %s28, %s31
      %p37 = scmp.eq.s32.totalorder %s18, 0
      %p38 = por %p36, %p37
      %p39 = scmp.ne.s32.totalorder %s28, %s31
      %p40 = scmp.eq.s32.totalorder %s23, 1
      %p41 = por %p39, %p40
      %p42 = scmp.ne.s32.totalorder %s31, %s32
      %p43 = scmp.eq.s32.totalorder %s23, 0
      %p44 = por %p42, %p43
      %p45 = scmp.ne.s32.totalorder %s31, %s32
      %p46 = scmp.eq.s32.totalorder %s24, 1
      %p47 = por %p45, %p46
      %p49 = scmp.ne.s32.totalorder %s32, %s48
      %p50 = scmp.eq.s32.totalorder %s24, 0
      %p51 = por %p49, %p50
      %s53 = sadd.s32 %s52, 1
      %p56 = scmp.eq.s32.totalorder %s18, 1
      %p57 = scmp.ne.s32.totalorder %s52, %s54
      %p58 = scmp.eq.s32.totalorder %s18, 0
      %p59 = por %p57, %p58
      %p60 = scmp.ne.s32.totalorder %s52, %s54
      %p61 = scmp.eq.s32.totalorder %s23, 1
      %p62 = por %p60, %p61
      %p63 = scmp.ne.s32.totalorder %s54, %s55
      %p64 = scmp.eq.s32.totalorder %s23, 0
      %p65 = por %p63, %p64
      %p66 = scmp.ne.s32.totalorder %s54, %s55
      %p67 = scmp.eq.s32.totalorder %s24, 1
      %p68 = por %p66, %p67
      %p70 = scmp.ne.s32.totalorder %s55, %s69
      %p71 = scmp.eq.s32.totalorder %s24, 0
      %p72 = por %p70, %p71
      %s74 = sadd.s32 %s73, 1
      %p77 = scmp.eq.s32.totalorder %s18, 1
      %p78 = scmp.ne.s32.totalorder %s73, %s75
      %p79 = scmp.eq.s32.totalorder %s18, 0
      %p80 = por %p78, %p79
      %p81 = scmp.ne.s32.totalorder %s73, %s75
      %p82 = scmp.eq.s32.totalorder %s23, 1
      %p83 = por %p81, %p82
      %p84 = scmp.ne.s32.totalorder %s75, %s76
      %p85 = scmp.eq.s32.totalorder %s23, 0
      %p86 = por %p84, %p85
      %p87 = scmp.ne.s32.totalorder %s75, %s76
      %p88 = scmp.eq.s32.totalorder %s24, 1
      %p89 = por %p87, %p88
      %p91 = scmp.ne.s32.totalorder %s76, %s90
      %p92 = scmp.eq.s32.totalorder %s24, 0
      %p93 = por %p91, %p92
      %s95 = sadd.s32 %s94, 1
      %p98 = scmp.eq.s32.totalorder %s18, 1
      %p99 = scmp.ne.s32.totalorder %s94, %s96
      %p100 = scmp.eq.s32.totalorder %s18, 0
      %p101 = por %p99, %p100
      %p102 = scmp.ne.s32.totalorder %s94, %s96
      %p103 = scmp.eq.s32.totalorder %s23, 1
      %p104 = por %p102, %p103
      %p105 = scmp.ne.s32.totalorder %s96, %s97
      %p106 = scmp.eq.s32.totalorder %s23, 0
      %p107 = por %p105, %p106
      %p108 = scmp.ne.s32.totalorder %s96, %s97
      %p109 = scmp.eq.s32.totalorder %s24, 1
      %p110 = por %p108, %p109
      %p112 = scmp.ne.s32.totalorder %s97, %s111
      %p113 = scmp.eq.s32.totalorder %s24, 0
      %p114 = por %p112, %p113
      %s116 = sadd.s32 %s115, 1
      %p119 = scmp.eq.s32.totalorder %s18, 1
      %p120 = scmp.ne.s32.totalorder %s115, %s117
      %p121 = scmp.eq.s32.totalorder %s18, 0
      %p122 = por %p120, %p121
      %p123 = scmp.ne.s32.totalorder %s115, %s117
      %p124 = scmp.eq.s32.totalorder %s23, 1
      %p125 = por %p123, %p124
      %p126 = scmp.ne.s32.totalorder %s117, %s118
      %p127 = scmp.eq.s32.totalorder %s23, 0
      %p128 = por %p126, %p127
      %p129 = scmp.ne.s32.totalorder %s117, %s118
      %p130 = scmp.eq.s32.totalorder %s24, 1
      %p131 = por %p129, %p130
      %p133 = scmp.ne.s32.totalorder %s118, %s132
      %p134 = scmp.eq.s32.totalorder %s24, 0
      %p135 = por %p133, %p134
      %s136 = ssub.s32 %s18, %s25
      %p137 = scmp.eq.s32.totalorder %s136, 0
      %s139 = sadd.s32 %s138, 1
      %s140 = scalar_select %p137, %s138, %s139
      %p143 = pneg %p137
      %p144 = scmp.eq.s32.totalorder %s18, 1
      %p145 = por %p143, %p144
      %p146 = scmp.ne.s32.totalorder %s138, %s141
      %p147 = scmp.eq.s32.totalorder %s18, 0
      %p148 = por %p146, %p147
      %p149 = scmp.ne.s32.totalorder %s138, %s141
      %p150 = scmp.eq.s32.totalorder %s23, 1
      %p151 = por %p149, %p150
      %p152 = scmp.ne.s32.totalorder %s141, %s142
      %p153 = scmp.eq.s32.totalorder %s23, 0
      %p154 = por %p152, %p153
      %p155 = scmp.ne.s32.totalorder %s141, %s142
      %p156 = scmp.eq.s32.totalorder %s24, 1
      %p157 = por %p155, %p156
      %p159 = scmp.ne.s32.totalorder %s142, %s158
      %p160 = scmp.eq.s32.totalorder %s24, 0
      %p161 = por %p159, %p160
      %p162 = scmp.le.s32.totalorder 1, %s18
      %p163 = scmp.lt.s32.totalorder %s18, 3
      %p164 = pnand %p162, %p163
      %p165 = pneg %p164
      // Predicated region
      $region9: #{tpu_custom_call.1} parent=5 // pred_check
        _
      $region10: #{tpu_custom_call.1} parent=5 // pred_check_branch
        %167 = sbr.rel (%p164) target = $region12
      $region11: #{tpu_custom_call.1} parent=5 // pred_region
        %s168 = ssub.s32 %s18, 1
        // Predicated region
        $region13: #{tpu_custom_call.1} parent=11 // pred_check
          %p169 = pneg %p65
        $region14: #{tpu_custom_call.1} parent=11 // pred_check_branch
          %171 = sbr.rel (%p169) target = $region16
        $region15: #{tpu_custom_call.1} parent=11 // pred_region
          %173 = vsyncadd [#allocation7], 0
          %s174 = sshll.u32 %s1, 4
          %s175 = int_to_ptr.hbm [resolvable:$true] %s174
          %s176 = sshll.u32 [#allocation6], 4
          %s177 = int_to_ptr.vmem [resolvable:$true] %s176
          %182 = dma.hbm_to_vmem [thread:$0]  %s175, 1024, %s177, [#allocation7], 64, 64, 4
        $region16: #{tpu_custom_call.1} parent=11 // pred_fallthru
          _
        // Predicated region
        $region17: #{tpu_custom_call.1} parent=11 // pred_check
          %p183 = pneg %p86
        $region18: #{tpu_custom_call.1} parent=11 // pred_check_branch
          %185 = sbr.rel (%p183) target = $region20
        $region19: #{tpu_custom_call.1} parent=11 // pred_region
          _
        $region20: #{tpu_custom_call.1} parent=11 // pred_fallthru
          _
        // Predicated region
        $region21: #{tpu_custom_call.1} parent=11 // pred_check
          %p186 = pneg %p107
        $region22: #{tpu_custom_call.1} parent=11 // pred_check_branch
          %188 = sbr.rel (%p186) target = $region24
        $region23: #{tpu_custom_call.1} parent=11 // pred_region
          %190 = vsyncadd [#allocation7], 0
          %s191 = sshll.u32 %s3, 4
          %s192 = int_to_ptr.hbm [resolvable:$true] %s191
          %s193 = sshll.u32 [#allocation8], 4
          %s194 = int_to_ptr.vmem [resolvable:$true] %s193
          %199 = dma.hbm_to_vmem [thread:$0]  %s192, 1024, %s194, [#allocation7], 64, 64, 4
        $region24: #{tpu_custom_call.1} parent=11 // pred_fallthru
          _
        // Predicated region
        $region25: #{tpu_custom_call.1} parent=11 // pred_check
          %p200 = pneg %p128
        $region26: #{tpu_custom_call.1} parent=11 // pred_check_branch
          %202 = sbr.rel (%p200) target = $region28
        $region27: #{tpu_custom_call.1} parent=11 // pred_region
          _
        $region28: #{tpu_custom_call.1} parent=11 // pred_fallthru
          _
      $region12: #{tpu_custom_call.1} parent=5 // pred_fallthru
        _
      %p203 = scmp.lt.s32.totalorder %s18, 2
      // Predicated region
      $region29: #{tpu_custom_call.1} parent=5 // pred_check
        %p204 = pneg %p203
      $region30: #{tpu_custom_call.1} parent=5 // pred_check_branch
        %206 = sbr.rel (%p204) target = $region32
      $region31: #{tpu_custom_call.1} parent=5 // pred_region
        // Predicated region
        $region33: #{tpu_custom_call.1} parent=31 // pred_check
          %p207 = pneg %p38
        $region34: #{tpu_custom_call.1} parent=31 // pred_check_branch
          %209 = sbr.rel (%p207) target = $region36
        $region35: #{tpu_custom_call.1} parent=31 // pred_region
          %s210 = sand.u32 %s28, 1
          %s211 = scalar_lea.sflag [#allocation4], %s210
          %s212 = sand.u32 %s28, 1
          %s213 = smul.addr %s212, 4
          %s214 = scalar_lea.vmem [#allocation3], %s213
          %216 = vsyncadd %s211, 0
          %s217 = smul.addr %s18, 4
          %s218 = scalar_lea.hbm %s0, %s217
          %s220 = sshll.u32 %s218, 4
          %s221 = int_to_ptr.hbm [resolvable:$true] %s220
          %s222 = sshll.u32 %s214, 4
          %s223 = int_to_ptr.vmem [resolvable:$true] %s222
          %225 = dma.hbm_to_vmem [thread:$0]  %s221, 64, %s223, %s211
        $region36: #{tpu_custom_call.1} parent=31 // pred_fallthru
          _
      $region32: #{tpu_custom_call.1} parent=5 // pred_fallthru
        _
      %p226 = scmp.le.s32.totalorder 1, %s18
      %p227 = scmp.lt.s32.totalorder %s18, 3
      %p228 = pnand %p226, %p227
      %p229 = pneg %p228
      // Predicated region
      $region37: #{tpu_custom_call.1} parent=5 // pred_check
        _
      $region38: #{tpu_custom_call.1} parent=5 // pred_check_branch
        %231 = sbr.rel (%p228) target = $region40
      $region39: #{tpu_custom_call.1} parent=5 // pred_region
        %s232 = ssub.s32 %s18, 1
        %s233 = sand.u32 %s31, 1
        %s234 = scalar_lea.sflag [#allocation4], %s233
        %s235 = sand.u32 %s31, 1
        %s236 = smul.addr %s235, 4
        %s237 = scalar_lea.vmem [#allocation3], %s236
        // Predicated region
        $region41: #{tpu_custom_call.1} parent=39 // pred_check
          %p238 = pneg %p44
        $region42: #{tpu_custom_call.1} parent=39 // pred_check_branch
          %240 = sbr.rel (%p238) target = $region44
        $region43: #{tpu_custom_call.1} parent=39 // pred_region
          %242 = dma.done %s234, 64
        $region44: #{tpu_custom_call.1} parent=39 // pred_fallthru
          _
        // Predicated region
        $region45: #{tpu_custom_call.1} parent=39 // pred_check
          %p243 = pneg %p65
        $region46: #{tpu_custom_call.1} parent=39 // pred_check_branch
          %245 = sbr.rel (%p243) target = $region48
        $region47: #{tpu_custom_call.1} parent=39 // pred_region
          %247 = dma.done [#allocation7], 1024
        $region48: #{tpu_custom_call.1} parent=39 // pred_fallthru
          _
        // Predicated region
        $region49: #{tpu_custom_call.1} parent=39 // pred_check
          %p248 = pneg %p107
        $region50: #{tpu_custom_call.1} parent=39 // pred_check_branch
          %250 = sbr.rel (%p248) target = $region52
        $region51: #{tpu_custom_call.1} parent=39 // pred_region
          %252 = dma.done [#allocation7], 1024
        $region52: #{tpu_custom_call.1} parent=39 // pred_fallthru
          _
        %s253 = sand.u32 %s31, 1
        %s254 = scalar_lea.sflag [#allocation4], %s253
        %s255 = sand.u32 %s31, 1
        %s256 = smul.addr %s255, 4
        %s257 = scalar_lea.vmem [#allocation3], %s256
        %p258 = pneg %p44
        %p259 = pneg %p41
        %p260 = pneg %p65
        %p261 = pneg %p62
        %p262 = pneg %p86
        %p263 = pneg %p83
        %p264 = pneg %p107
        %p265 = pneg %p104
        %p266 = pneg %p128
        %p267 = pneg %p125
        %p268 = pneg %p154
        %p269 = pneg %p151
        %s270 = sand.u32 %s141, 1
        %s271 = scalar_lea.sflag [#allocation5], %s270
        %s272 = sand.u32 %s141, 1
        %s273 = smul.addr %s272, 4
        %s274 = scalar_lea.vmem [#allocation9], %s273
        %v275 = vld [vmem:[%s237] sm:$0xf]
        %276 = vst [vmem:[#allocation2] sm:$0xff] 0.0
        %v277 = vld [vmem:[#allocation6] sm:$0xf]
        %v278 = vld [vmem:[#allocation6 + $0x4] sm:$0xf]
        %v279 = vld [vmem:[#allocation6 + $0x8] sm:$0xf]
        %v280 = vld [vmem:[#allocation6 + $0xc] sm:$0xf]
        %v281 = vld [vmem:[#allocation6 + $0x10] sm:$0xf]
        %v282 = vld [vmem:[#allocation6 + $0x14] sm:$0xf]
        %v283 = vld [vmem:[#allocation6 + $0x18] sm:$0xf]
        %v284 = vld [vmem:[#allocation6 + $0x1c] sm:$0xf]
        %v285 = vld [vmem:[#allocation6 + $0x20] sm:$0xf]
        %v286 = vld [vmem:[#allocation6 + $0x24] sm:$0xf]
        %v287 = vld [vmem:[#allocation6 + $0x28] sm:$0xf]
        %v288 = vld [vmem:[#allocation6 + $0x2c] sm:$0xf]
        %v289 = vld [vmem:[#allocation6 + $0x30] sm:$0xf]
        %v290 = vld [vmem:[#allocation6 + $0x34] sm:$0xf]
        %v291 = vld [vmem:[#allocation6 + $0x38] sm:$0xf]
        %v292 = vld [vmem:[#allocation6 + $0x3c] sm:$0xf]
        %v293 = vld [vmem:[%s2] sm:$0x1]
        %v295 = vperm.slane %v293, 0
        %v313 = vunpack.c.l.b16 %v277
        %v314 = vunpack.c.l.b16 %v278
        %v315 = vunpack.c.l.b16 %v279
        %v316 = vunpack.c.l.b16 %v280
        %v317 = vunpack.c.l.b16 %v281
        %v318 = vunpack.c.l.b16 %v282
        %v319 = vunpack.c.l.b16 %v283
        %v320 = vunpack.c.l.b16 %v284
        %v321 = vunpack.c.l.b16 %v285
        %v322 = vunpack.c.l.b16 %v286
        %v323 = vunpack.c.l.b16 %v287
        %v324 = vunpack.c.l.b16 %v288
        %v325 = vunpack.c.l.b16 %v289
        %v326 = vunpack.c.l.b16 %v290
        %v327 = vunpack.c.l.b16 %v291
        %v328 = vunpack.c.l.b16 %v292
        %v329 = vpack.c.b16 %v314, %v313
        %v330 = vpack.c.b16 %v316, %v315
        %v331 = vpack.c.b16 %v318, %v317
        %v332 = vpack.c.b16 %v320, %v319
        %v333 = vpack.c.b16 %v322, %v321
        %v334 = vpack.c.b16 %v324, %v323
        %v335 = vpack.c.b16 %v326, %v325
        %v336 = vpack.c.b16 %v328, %v327
        %345 = vmatpush.bf16.msra.mxu0 %v336
        %346 = vmatpush.bf16.msra.mxu0 %v335
        %347 = vmatpush.bf16.msra.mxu0 %v334
        %348 = vmatpush.bf16.msra.mxu0 %v333
        %349 = vmatpush.bf16.msra.mxu0 %v332
        %350 = vmatpush.bf16.msra.mxu0 %v331
        %351 = vmatpush.bf16.msra.mxu0 %v330
        %352 = vmatpush.bf16.msra.mxu0 %v329
        %353 = vmatmul.bf16.gmra.mxu0 %v275
        %v354 = vpop.f32.mrf.mxu0
        %v355 = vadd.f32 %v295, %v354
        %v356 = vpop.f32.mrf.mxu0
        %357 = vdwg.mxu0
        %v358 = vmul.f32 %v355, 0.5
        %v359 = vmul.f32 %v355, 0.044715
        %v360 = vmul.f32 %v359, %v355
        %v361 = vmul.f32 %v360, %v355
        %v362 = vadd.f32 %v355, %v361
        %v363 = vmul.f32 %v362, 0.7978846
        %v364 = vtanh.pop %v363
        %v365 = vadd.f32 %v364, 1.0
        %v366 = vmul.f32 %v358, %v365
        %v367 = vpack.c.bf16 %v366, %v366
        %v368 = vld [vmem:[#allocation2] sm:$0xff]
        %v369 = vld [vmem:[#allocation8] sm:$0xf]
        %v370 = vld [vmem:[#allocation8 + $0x4] sm:$0xf]
        %v371 = vld [vmem:[#allocation8 + $0x8] sm:$0xf]
        %v372 = vld [vmem:[#allocation8 + $0xc] sm:$0xf]
        %v373 = vld [vmem:[#allocation8 + $0x10] sm:$0xf]
        %v374 = vld [vmem:[#allocation8 + $0x14] sm:$0xf]
        %v375 = vld [vmem:[#allocation8 + $0x18] sm:$0xf]
        %v376 = vld [vmem:[#allocation8 + $0x1c] sm:$0xf]
        %v377 = vld [vmem:[#allocation8 + $0x20] sm:$0xf]
        %v378 = vld [vmem:[#allocation8 + $0x24] sm:$0xf]
        %v379 = vld [vmem:[#allocation8 + $0x28] sm:$0xf]
        %v380 = vld [vmem:[#allocation8 + $0x2c] sm:$0xf]
        %v381 = vld [vmem:[#allocation8 + $0x30] sm:$0xf]
        %v382 = vld [vmem:[#allocation8 + $0x34] sm:$0xf]
        %v383 = vld [vmem:[#allocation8 + $0x38] sm:$0xf]
        %v384 = vld [vmem:[#allocation8 + $0x3c] sm:$0xf]
        %v401 = vunpack.c.l.b16 %v369
        %v402 = vunpack.c.l.b16 %v370
        %v403 = vunpack.c.l.b16 %v371
        %v404 = vunpack.c.l.b16 %v372
        %v405 = vunpack.c.l.b16 %v373
        %v406 = vunpack.c.l.b16 %v374
        %v407 = vunpack.c.l.b16 %v375
        %v408 = vunpack.c.l.b16 %v376
        %v409 = vunpack.c.l.b16 %v377
        %v410 = vunpack.c.l.b16 %v378
        %v411 = vunpack.c.l.b16 %v379
        %v412 = vunpack.c.l.b16 %v380
        %v413 = vunpack.c.l.b16 %v381
        %v414 = vunpack.c.l.b16 %v382
        %v415 = vunpack.c.l.b16 %v383
        %v416 = vunpack.c.l.b16 %v384
        %v417 = vpack.c.b16 %v402, %v401
        %v418 = vpack.c.b16 %v404, %v403
        %v419 = vpack.c.b16 %v406, %v405
        %v420 = vpack.c.b16 %v408, %v407
        %v421 = vpack.c.b16 %v410, %v409
        %v422 = vpack.c.b16 %v412, %v411
        %v423 = vpack.c.b16 %v414, %v413
        %v424 = vpack.c.b16 %v416, %v415
        %433 = vmatpush.bf16.msra.mxu0 %v424
        %434 = vmatpush.bf16.msra.mxu0 %v423
        %435 = vmatpush.bf16.msra.mxu0 %v422
        %436 = vmatpush.bf16.msra.mxu0 %v421
        %437 = vmatpush.bf16.msra.mxu0 %v420
        %438 = vmatpush.bf16.msra.mxu0 %v419
        %439 = vmatpush.bf16.msra.mxu0 %v418
        %440 = vmatpush.bf16.msra.mxu0 %v417
        %441 = vmatmul.bf16.gmra.mxu0 %v367
        %v442 = vpop.f32.mrf.mxu0
        %v443 = vadd.f32 0.0, %v442
        %v444 = vpop.f32.mrf.mxu0
        %445 = vdwg.mxu0
        %v446 = vadd.f32 %v368, %v443
        %447 = vst [vmem:[#allocation2] sm:$0xff] %v446
        %v448 = vld [vmem:[#allocation2] sm:$0xff]
        %v449 = vld [vmem:[%s4] sm:$0x1]
        %v451 = vperm.slane %v449, 0
        %v453 = vadd.f32 %v448, %v451
        %v454 = vpack.c.bf16 %v453, %v453
        %455 = vst [vmem:[%s274] sm:$0xf] %v454
        %s456 = sand.u32 %s141, 1
        %s457 = scalar_lea.sflag [#allocation5], %s456
        %s458 = sand.u32 %s141, 1
        %s459 = smul.addr %s458, 4
        %s460 = scalar_lea.vmem [#allocation9], %s459
        // Predicated region
        $region53: #{tpu_custom_call.1} parent=39 // pred_check
          %p461 = pneg %p151
        $region54: #{tpu_custom_call.1} parent=39 // pred_check_branch
          %463 = sbr.rel (%p461) target = $region56
        $region55: #{tpu_custom_call.1} parent=39 // pred_region
          %465 = vsyncadd %s457, 0
          %s466 = smul.addr %s23, 4
          %s467 = scalar_lea.hbm %s5, %s466
          %s469 = sshll.u32 %s460, 4
          %s470 = int_to_ptr.vmem [resolvable:$true] %s469
          %s471 = sshll.u32 %s467, 4
          %s472 = int_to_ptr.hbm [resolvable:$true] %s471
          %474 = dma.vmem_to_hbm [thread:$0]  %s470, 64, %s472, %s457
        $region56: #{tpu_custom_call.1} parent=39 // pred_fallthru
          _
      $region40: #{tpu_custom_call.1} parent=5 // pred_fallthru
        _
      %p475 = scmp.le.s32.totalorder 2, %s18
      // Predicated region
      $region57: #{tpu_custom_call.1} parent=5 // pred_check
        %p476 = pneg %p475
      $region58: #{tpu_custom_call.1} parent=5 // pred_check_branch
        %478 = sbr.rel (%p476) target = $region60
      $region59: #{tpu_custom_call.1} parent=5 // pred_region
        %s479 = ssub.s32 %s18, 2
        // Predicated region
        $region61: #{tpu_custom_call.1} parent=59 // pred_check
          %p480 = pneg %p157
        $region62: #{tpu_custom_call.1} parent=59 // pred_check_branch
          %482 = sbr.rel (%p480) target = $region64
        $region63: #{tpu_custom_call.1} parent=59 // pred_region
          %s483 = sand.u32 %s142, 1
          %s484 = scalar_lea.sflag [#allocation5], %s483
          %s485 = sand.u32 %s142, 1
          %s486 = smul.addr %s485, 4
          %s487 = scalar_lea.vmem [#allocation9], %s486
          %489 = dma.done %s484, 64
        $region64: #{tpu_custom_call.1} parent=59 // pred_fallthru
          _
      $region60: #{tpu_custom_call.1} parent=5 // pred_fallthru
        _
    $region6: #{tpu_custom_call.1} parent=1 // loop_footer
      %s22 = sadd.s32 1, %s18
    $region7: #{tpu_custom_call.1} parent=1 // loop_footer_branch
      %17 = sbr.rel target = $region3
    $region8: #{tpu_custom_call.1} parent=1 // loop_exit
      _
    %490 = vsyncpa [#allocation4], 1
    %s491 = scalar_lea.sflag [#allocation4], 1
    %492 = vsyncpa %s491, 1
    %493 = vsyncpa [#allocation7], 1
    %494 = vsyncpa [#allocation5], 1
    %s495 = scalar_lea.sflag [#allocation5], 1
    %496 = vsyncpa %s495, 1

</llo_original>
